<compile_context>
chip_gen: v6e
topology: v6e:2x2x1
jax: 0.10.0
libtpu: 0.0.40
codegen_flags: <defaults>
</compile_context>

<pallas_src>
import jax
import jax.numpy as jnp
from jax.experimental import pallas as pl
from jax.experimental.pallas import tpu as pltpu


def mlp_kernel(x_ref, w1_ref, b1_ref, w2_ref, b2_ref, o_ref):
    # hidden = relu(x @ w1 + b1)
    h = jnp.dot(x_ref[...], w1_ref[...], preferred_element_type=jnp.float32)
    h = jnp.maximum(h + b1_ref[...], 0.0)          # (B, H) + (1, H) broadcast
    # out = sigmoid(h @ w2 + b2)
    z = jnp.dot(h, w2_ref[...], preferred_element_type=jnp.float32)
    z = z + b2_ref[...]                            # (B, O) + (1, O) broadcast
    o_ref[...] = jax.nn.sigmoid(z).astype(o_ref.dtype)


def mlp_forward(x, w1, b1, w2, b2, *, block_b=2048):
    """sigmoid(relu(x @ w1 + b1) @ w2 + b2) as a Pallas TPU kernel.

    x:  (B, F)   w1: (F, H)   b1: (1, H)   w2: (H, O)   b2: (1, O)
    """
    B, F = x.shape
    H = w1.shape[1]
    O = w2.shape[1]

    # Advisory cost hint for XLA scheduling around this sub-microsecond kernel.
    cost = pl.CostEstimate(
        flops=2 * B * (F * H + H * O),
        transcendentals=B * O,                       # sigmoid -> exp
        bytes_accessed=4 * (B * F + F * H + H + H * O + O + B * O),
    )

    if B <= block_b:
        # Small problem: no grid, no pipelining machinery.  Whole arrays live in
        # VMEM for the single kernel invocation; any B works (no alignment pad).
        return pl.pallas_call(
            mlp_kernel,
            out_shape=jax.ShapeDtypeStruct((B, O), x.dtype),
            in_specs=[pl.BlockSpec(memory_space=pltpu.MemorySpace.VMEM)] * 5,
            out_specs=pl.BlockSpec(memory_space=pltpu.MemorySpace.VMEM),
            cost_estimate=cost,
        )(x, w1, b1, w2, b2)

    # Large batches: tile the batch axis with a ragged last block (Pallas masks
    # the out-of-range rows on store; garbage rows are never reduced or written),
    # keep weights/biases VMEM-resident via constant index_maps, and shard the
    # batch axis across TensorCores on v7x.
    nb = pl.cdiv(B, block_b)
    return pl.pallas_call(
        mlp_kernel,
        out_shape=jax.ShapeDtypeStruct((B, O), x.dtype),
        grid=(nb,),
        in_specs=[
            pl.BlockSpec((block_b, F), lambda i: (i, 0)),   # x tile follows grid
            pl.BlockSpec((F, H), lambda i: (0, 0)),         # weights resident
            pl.BlockSpec((1, H), lambda i: (0, 0)),
            pl.BlockSpec((H, O), lambda i: (0, 0)),
            pl.BlockSpec((1, O), lambda i: (0, 0)),
        ],
        out_specs=pl.BlockSpec((block_b, O), lambda i: (i, 0)),
        compiler_params=pltpu.CompilerParams(
            dimension_semantics=("parallel",),
        ),
        cost_estimate=cost,
    )(x, w1, b1, w2, b2)


def _reference(x, w1, b1, w2, b2):
    return jax.nn.sigmoid(jnp.maximum(x @ w1 + b1, 0.0) @ w2 + b2)


if __name__ == "__main__":
    # Model(n_features=32, n_neurons=64, n_out=16)
    n_features, n_neurons, n_out = 32, 64, 16

    key = jax.random.PRNGKey(0)
    kx, kw1, kb1, kw2, kb2, kx2 = jax.random.split(key, 6)

    # Deterministic synthetic params (PyTorch-like uniform init scale).
    w1 = jax.random.uniform(kw1, (n_features, n_neurons), dtype=jnp.float32,
                            minval=-1.0 / jnp.sqrt(n_features),
                            maxval=1.0 / jnp.sqrt(n_features))
    b1 = jax.random.uniform(kb1, (1, n_neurons), dtype=jnp.float32,
                            minval=-1.0 / jnp.sqrt(n_features),
                            maxval=1.0 / jnp.sqrt(n_features))
    w2 = jax.random.uniform(kw2, (n_neurons, n_out), dtype=jnp.float32,
                            minval=-1.0 / jnp.sqrt(n_neurons),
                            maxval=1.0 / jnp.sqrt(n_neurons))
    b2 = jax.random.uniform(kb2, (1, n_out), dtype=jnp.float32,
                            minval=-1.0 / jnp.sqrt(n_neurons),
                            maxval=1.0 / jnp.sqrt(n_neurons))

    # --- small batch: grid-less, single-tile path -------------------------------
    batch = 8
    x = jax.random.normal(kx, (batch, n_features), dtype=jnp.float32)
    out = mlp_forward(x, w1, b1, w2, b2)
    jax.block_until_ready(out)
    ref = _reference(x, w1, b1, w2, b2)
    assert out.shape == (batch, n_out)
    assert jnp.allclose(out, ref, atol=2e-5, rtol=1e-5), "small-batch mismatch"

    # --- larger batch: batch-tiled grid path with a ragged last block -----------
    # (200 rows, block_b=64 -> grid of 4, last block only partially valid)
    big_batch = 200
    x_big = jax.random.normal(kx2, (big_batch, n_features), dtype=jnp.float32)
    out_big = mlp_forward(x_big, w1, b1, w2, b2, block_b=64)
    jax.block_until_ready(out_big)
    ref_big = _reference(x_big, w1, b1, w2, b2)
    assert out_big.shape == (big_batch, n_out)
    assert jnp.allclose(out_big, ref_big, atol=2e-5, rtol=1e-5), "big-batch mismatch"

    print("KERNEL_OK")
</pallas_src>

<mosaic_0001>
module attributes {stable_mosaic.version = 11 : i64} {
  func.func @mlp_kernel(%arg0: memref<8x32xf32, #tpu.memory_space<vmem>>, %arg1: memref<32x64xf32, #tpu.memory_space<vmem>>, %arg2: memref<1x64xf32, #tpu.memory_space<vmem>>, %arg3: memref<64x16xf32, #tpu.memory_space<vmem>>, %arg4: memref<1x16xf32, #tpu.memory_space<vmem>>, %arg5: memref<8x16xf32, #tpu.memory_space<vmem>>) attributes {dimension_semantics = [], scalar_prefetch = 0 : i64, scratch_operands = 0 : i64, tpu.core_type = #tpu.core_type<tc>} {
    %c0 = arith.constant 0 : index
    %c0_0 = arith.constant 0 : index
    %0 = vector.load %arg0[%c0, %c0_0] : memref<8x32xf32, #tpu.memory_space<vmem>>, vector<8x32xf32>
    %c0_1 = arith.constant 0 : index
    %c0_2 = arith.constant 0 : index
    %1 = vector.load %arg1[%c0_1, %c0_2] : memref<32x64xf32, #tpu.memory_space<vmem>>, vector<32x64xf32>
    %cst = arith.constant dense<0.000000e+00> : vector<8x64xf32>
    %2 = tpu.matmul %0, %1, %cst {dimension_numbers = #tpu.dot_dimension_numbers<[1], [0], [0], [1], [0, 0, 1, 1], [], []>} : vector<8x32xf32>, vector<32x64xf32>, vector<8x64xf32> -> vector<8x64xf32>
    %c0_3 = arith.constant 0 : index
    %c0_4 = arith.constant 0 : index
    %3 = vector.load %arg2[%c0_3, %c0_4] : memref<1x64xf32, #tpu.memory_space<vmem>>, vector<1x64xf32>
    %4 = vector.broadcast %3 : vector<1x64xf32> to vector<8x64xf32>
    %5 = arith.addf %2, %4 : vector<8x64xf32>
    %cst_5 = arith.constant 0.000000e+00 : f32
    %6 = vector.broadcast %cst_5 : f32 to vector<8x64xf32>
    %7 = arith.maximumf %5, %6 : vector<8x64xf32>
    %c0_6 = arith.constant 0 : index
    %c0_7 = arith.constant 0 : index
    %8 = vector.load %arg3[%c0_6, %c0_7] : memref<64x16xf32, #tpu.memory_space<vmem>>, vector<64x16xf32>
    %cst_8 = arith.constant dense<0.000000e+00> : vector<8x16xf32>
    %9 = tpu.matmul %7, %8, %cst_8 {dimension_numbers = #tpu.dot_dimension_numbers<[1], [0], [0], [1], [0, 0, 1, 1], [], []>} : vector<8x64xf32>, vector<64x16xf32>, vector<8x16xf32> -> vector<8x16xf32>
    %c0_9 = arith.constant 0 : index
    %c0_10 = arith.constant 0 : index
    %10 = vector.load %arg4[%c0_9, %c0_10] : memref<1x16xf32, #tpu.memory_space<vmem>>, vector<1x16xf32>
    %11 = vector.broadcast %10 : vector<1x16xf32> to vector<8x16xf32>
    %12 = arith.addf %9, %11 : vector<8x16xf32>
    %13 = arith.negf %12 : vector<8x16xf32>
    %14 = math.exp %13 : vector<8x16xf32>
    %cst_11 = arith.constant 1.000000e+00 : f32
    %15 = vector.broadcast %cst_11 : f32 to vector<8x16xf32>
    %16 = arith.addf %15, %14 : vector<8x16xf32>
    %17 = arith.divf %15, %16 : vector<8x16xf32>
    %c0_12 = arith.constant 0 : index
    %c0_13 = arith.constant 0 : index
    %18 = vector.load %arg5[%c0_12, %c0_13] : memref<8x16xf32, #tpu.memory_space<vmem>>, vector<8x16xf32>
    tpu.vector_store %arg5[%c0_12, %c0_13], %17 {strides = array<i32>} : memref<8x16xf32, #tpu.memory_space<vmem>>, vector<8x16xf32>,
    return
  }
}

</mosaic_0001>

<llo_original>
// kernel: tpu_custom_call.1
$region0: #{tpu_custom_call.1}
  #allocation0 [shape = 'u32[]', space=smem, size = 0x4, offset = 0x4, fixed_abs, tag = 'smem constant byte address 0x4 - core index']
  #allocation1 [shape = 'u32[144,128]{1,0:T(1,128)}', space=vmem, size = 0x12000, scoped, tag = 'internal scratch']
  %s0 = inlined_call_operand.vmem [shape: f32[8,32], index: 0, kind: input, shape index: {}]
  %s1 = inlined_call_operand.vmem [shape: f32[32,64], index: 1, kind: input, shape index: {}]
  %s2 = inlined_call_operand.vmem [shape: f32[1,64], index: 2, kind: input, shape index: {}]
  %s3 = inlined_call_operand.vmem [shape: f32[64,16], index: 3, kind: input, shape index: {}]
  %s4 = inlined_call_operand.vmem [shape: f32[1,16], index: 4, kind: input, shape index: {}]
  %s5 = inlined_call_operand.hbm [shape: f32[8,16], index: 5, kind: output, shape index: {}]
  %s6 = sld [smem:[#allocation0]]
  $region30: #{tpu_custom_call.1} parent=0
    _
  %s8 = ssub.s32 1, %s6
  %s9 = scalar_select 0, %s8, %s6
  $region1: #{tpu_custom_call.1} parent=0
    #allocation2 [shape = 'u8[4096]{0}', space=vmem, size = 0x1000, scoped, tag = 'output window, operand 0, single buffered']
    #allocation3 [shape = 's32[1]{0}', space=sflag, size = 0x4, scoped, tag = 'scoped memory for tpu_custom_call.1']
    %10 = vsyncpa [#allocation3], 0
    // Predicated region
    $region2: #{tpu_custom_call.1} parent=1 // pred_check
      _
    $region3: #{tpu_custom_call.1} parent=1 // pred_check_branch
      %12 = sbr.rel (0) target = $region5
    $region4: #{tpu_custom_call.1} parent=1 // pred_region
      _
    $region5: #{tpu_custom_call.1} parent=1 // pred_fallthru
      _
    // Predicated region
    $region6: #{tpu_custom_call.1} parent=1 // pred_check
      _
    $region7: #{tpu_custom_call.1} parent=1 // pred_check_branch
      %14 = sbr.rel (0) target = $region9
    $region8: #{tpu_custom_call.1} parent=1 // pred_region
      _
    $region9: #{tpu_custom_call.1} parent=1 // pred_fallthru
      _
    // Predicated region
    $region10: #{tpu_custom_call.1} parent=1 // pred_check
      _
    $region11: #{tpu_custom_call.1} parent=1 // pred_check_branch
      %16 = sbr.rel (0) target = $region13
    $region12: #{tpu_custom_call.1} parent=1 // pred_region
      _
    $region13: #{tpu_custom_call.1} parent=1 // pred_fallthru
      _
    // Predicated region
    $region14: #{tpu_custom_call.1} parent=1 // pred_check
      _
    $region15: #{tpu_custom_call.1} parent=1 // pred_check_branch
      %18 = sbr.rel (0) target = $region17
    $region16: #{tpu_custom_call.1} parent=1 // pred_region
      _
    $region17: #{tpu_custom_call.1} parent=1 // pred_fallthru
      _
    // Predicated region
    $region18: #{tpu_custom_call.1} parent=1 // pred_check
      _
    $region19: #{tpu_custom_call.1} parent=1 // pred_check_branch
      %20 = sbr.rel (0) target = $region21
    $region20: #{tpu_custom_call.1} parent=1 // pred_region
      _
    $region21: #{tpu_custom_call.1} parent=1 // pred_fallthru
      _
    %v21 = vld [vmem:[%s0] sm:$0xff]
    %v22 = vld [vmem:[%s1] sm:$0xff]
    %v23 = vld [vmem:[%s1 + $0x8] sm:$0xff]
    %v24 = vld [vmem:[%s1 + $0x10] sm:$0xff]
    %v25 = vld [vmem:[%s1 + $0x18] sm:$0xff]
    %v26 = vld [vmem:[%s2] sm:$0x1]
    %v28 = vlaneseq
    %v29 = vshrl.u32 %v28, 7
    %v30 = vsub.s32 0, %v29
    %v31 = vrot.slane %v26, %v30
    %vm33 = vcmask 261120
    %v35 = vsel %vm33, %v21, 0
    %37 = vmatprep.subr.mxu0 0.0
    %38 = vmatpush1.msra.mxu0 0.0
    %39 = vmatprep.subr.mxu0 0.0
    %40 = vmatpush1.msra.mxu0 0.0
    %41 = vmatprep.subr.mxu0 0.0
    %42 = vmatpush1.msra.mxu0 0.0
    %43 = vmatprep.subr.mxu0 0.0
    %44 = vmatpush1.msra.mxu0 0.0
    %45 = vmatprep.subr.mxu0 0.0
    %46 = vmatpush1.msra.mxu0 0.0
    %47 = vmatprep.subr.mxu0 0.0
    %48 = vmatpush1.msra.mxu0 0.0
    %49 = vmatprep.subr.mxu0 0.0
    %50 = vmatpush1.msra.mxu0 0.0
    %51 = vmatprep.subr.mxu0 0.0
    %52 = vmatpush1.msra.mxu0 0.0
    %53 = vmatprep.subr.mxu0 0.0
    %54 = vmatpush1.msra.mxu0 0.0
    %55 = vmatprep.subr.mxu0 0.0
    %56 = vmatpush1.msra.mxu0 0.0
    %57 = vmatprep.subr.mxu0 0.0
    %58 = vmatpush1.msra.mxu0 0.0
    %59 = vmatprep.subr.mxu0 0.0
    %60 = vmatpush1.msra.mxu0 0.0
    %61 = vmatprep.subr.mxu0 0.0
    %62 = vmatpush1.msra.mxu0 %v25
    %63 = vmatprep.subr.mxu0 0.0
    %64 = vmatpush1.msra.mxu0 %v24
    %65 = vmatprep.subr.mxu0 0.0
    %66 = vmatpush1.msra.mxu0 %v23
    %67 = vmatprep.subr.mxu0 0.0
    %68 = vmatpush1.msra.mxu0 %v22
    %69 = vmatprep.subr.mxu0 0.0
    %70 = vmatpush2.msra.mxu0 0.0
    %71 = vmatprep.subr.mxu0 0.0
    %72 = vmatpush2.msra.mxu0 0.0
    %73 = vmatprep.subr.mxu0 0.0
    %74 = vmatpush2.msra.mxu0 0.0
    %75 = vmatprep.subr.mxu0 0.0
    %76 = vmatpush2.msra.mxu0 0.0
    %77 = vmatprep.subr.mxu0 0.0
    %78 = vmatpush2.msra.mxu0 0.0
    %79 = vmatprep.subr.mxu0 0.0
    %80 = vmatpush2.msra.mxu0 0.0
    %81 = vmatprep.subr.mxu0 0.0
    %82 = vmatpush2.msra.mxu0 0.0
    %83 = vmatprep.subr.mxu0 0.0
    %84 = vmatpush2.msra.mxu0 0.0
    %85 = vmatprep.subr.mxu0 0.0
    %86 = vmatpush2.msra.mxu0 0.0
    %87 = vmatprep.subr.mxu0 0.0
    %88 = vmatpush2.msra.mxu0 0.0
    %89 = vmatprep.subr.mxu0 0.0
    %90 = vmatpush2.msra.mxu0 0.0
    %91 = vmatprep.subr.mxu0 0.0
    %92 = vmatpush2.msra.mxu0 0.0
    %93 = vmatprep.subr.mxu0 0.0
    %94 = vmatpush2.msra.mxu0 0.0
    %95 = vmatprep.subr.mxu0 0.0
    %96 = vmatpush2.msra.mxu0 0.0
    %97 = vmatprep.subr.mxu0 0.0
    %98 = vmatpush2.msra.mxu0 0.0
    %99 = vmatprep.subr.mxu0 0.0
    %100 = vmatpush2.msra.mxu0 0.0
    %101 = vmatprep.mubr.f32.mxu0 0.0
    %102 = vmatmul.mubr.f32.gmra.mxu0 %v35
    %v103 = vpop.f32.mrf.mxu0
    %v104 = vadd.f32 %v31, %v103
    %v105 = vpop.f32.mrf.mxu0
    %106 = vdwg.mxu0
    %v107 = vmax.f32 %v104, 0.0
    %v108 = vld [vmem:[%s3] sm:$0xff]
    %v109 = vld [vmem:[%s3 + $0x8] sm:$0xff]
    %v110 = vld [vmem:[%s3 + $0x10] sm:$0xff]
    %v111 = vld [vmem:[%s3 + $0x18] sm:$0xff]
    %v112 = vld [vmem:[%s3 + $0x20] sm:$0xff]
    %v113 = vld [vmem:[%s3 + $0x28] sm:$0xff]
    %v114 = vld [vmem:[%s3 + $0x30] sm:$0xff]
    %v115 = vld [vmem:[%s3 + $0x38] sm:$0xff]
    %v116 = vld [vmem:[%s4] sm:$0x1]
    %v118 = vlaneseq
    %v119 = vshrl.u32 %v118, 7
    %v120 = vsub.s32 0, %v119
    %v121 = vrot.slane %v116, %v120
    %vm123 = vcmask 523264
    %v125 = vsel %vm123, %v107, 0
    %127 = vmatprep.subr.mxu0 0.0
    %128 = vmatpush1.msra.mxu0 0.0
    %129 = vmatprep.subr.mxu0 0.0
    %130 = vmatpush1.msra.mxu0 0.0
    %131 = vmatprep.subr.mxu0 0.0
    %132 = vmatpush1.msra.mxu0 0.0
    %133 = vmatprep.subr.mxu0 0.0
    %134 = vmatpush1.msra.mxu0 0.0
    %135 = vmatprep.subr.mxu0 0.0
    %136 = vmatpush1.msra.mxu0 0.0
    %137 = vmatprep.subr.mxu0 0.0
    %138 = vmatpush1.msra.mxu0 0.0
    %139 = vmatprep.subr.mxu0 0.0
    %140 = vmatpush1.msra.mxu0 0.0
    %141 = vmatprep.subr.mxu0 0.0
    %142 = vmatpush1.msra.mxu0 0.0
    %143 = vmatprep.subr.mxu0 0.0
    %144 = vmatpush1.msra.mxu0 %v115
    %145 = vmatprep.subr.mxu0 0.0
    %146 = vmatpush1.msra.mxu0 %v114
    %147 = vmatprep.subr.mxu0 0.0
    %148 = vmatpush1.msra.mxu0 %v113
    %149 = vmatprep.subr.mxu0 0.0
    %150 = vmatpush1.msra.mxu0 %v112
    %151 = vmatprep.subr.mxu0 0.0
    %152 = vmatpush1.msra.mxu0 %v111
    %153 = vmatprep.subr.mxu0 0.0
    %154 = vmatpush1.msra.mxu0 %v110
    %155 = vmatprep.subr.mxu0 0.0
    %156 = vmatpush1.msra.mxu0 %v109
    %157 = vmatprep.subr.mxu0 0.0
    %158 = vmatpush1.msra.mxu0 %v108
    %159 = vmatprep.subr.mxu0 0.0
    %160 = vmatpush2.msra.mxu0 0.0
    %161 = vmatprep.subr.mxu0 0.0
    %162 = vmatpush2.msra.mxu0 0.0
    %163 = vmatprep.subr.mxu0 0.0
    %164 = vmatpush2.msra.mxu0 0.0
    %165 = vmatprep.subr.mxu0 0.0
    %166 = vmatpush2.msra.mxu0 0.0
    %167 = vmatprep.subr.mxu0 0.0
    %168 = vmatpush2.msra.mxu0 0.0
    %169 = vmatprep.subr.mxu0 0.0
    %170 = vmatpush2.msra.mxu0 0.0
    %171 = vmatprep.subr.mxu0 0.0
    %172 = vmatpush2.msra.mxu0 0.0
    %173 = vmatprep.subr.mxu0 0.0
    %174 = vmatpush2.msra.mxu0 0.0
    %175 = vmatprep.subr.mxu0 0.0
    %176 = vmatpush2.msra.mxu0 0.0
    %177 = vmatprep.subr.mxu0 0.0
    %178 = vmatpush2.msra.mxu0 0.0
    %179 = vmatprep.subr.mxu0 0.0
    %180 = vmatpush2.msra.mxu0 0.0
    %181 = vmatprep.subr.mxu0 0.0
    %182 = vmatpush2.msra.mxu0 0.0
    %183 = vmatprep.subr.mxu0 0.0
    %184 = vmatpush2.msra.mxu0 0.0
    %185 = vmatprep.subr.mxu0 0.0
    %186 = vmatpush2.msra.mxu0 0.0
    %187 = vmatprep.subr.mxu0 0.0
    %188 = vmatpush2.msra.mxu0 0.0
    %189 = vmatprep.subr.mxu0 0.0
    %190 = vmatpush2.msra.mxu0 0.0
    %191 = vmatprep.mubr.f32.mxu0 0.0
    %192 = vmatmul.mubr.f32.gmra.mxu0 %v125
    %v193 = vpop.f32.mrf.mxu0
    %v194 = vadd.f32 %v121, %v193
    %v195 = vpop.f32.mrf.mxu0
    %196 = vdwg.mxu0
    %v197 = vxor.u32 %v194, 2147483648
    %v198 = vmul.f32 %v197, 1.442695
    %v199 = vpow.pop %v198
    %v200 = vadd.f32 %v199, 1.0
    %v201 = vrcp.pop %v200
    %v202 = vmul.f32 1.0, %v201
    %vm203 = vcmask 130048
    %204 = vst.msk [vmem:[#allocation2] sm:$0xff] %vm203, %v202
    // Predicated region
    $region22: #{tpu_custom_call.1} parent=1 // pred_check
      _
    $region23: #{tpu_custom_call.1} parent=1 // pred_check_branch
      %206 = sbr.rel (0) target = $region25
    $region24: #{tpu_custom_call.1} parent=1 // pred_region
      %s208 = ssub.s32 128, 128
      %209 = vsyncadd [#allocation3], %s208
      %s211 = sshll.u32 [#allocation2], 4
      %s212 = int_to_ptr.vmem [resolvable:$true] %s211
      %214 = dma.vmem_to_hbm [thread:$0]  %s212, 128, %s5, [#allocation3]
    $region25: #{tpu_custom_call.1} parent=1 // pred_fallthru
      _
    // Predicated region
    $region26: #{tpu_custom_call.1} parent=1 // pred_check
      _
    $region27: #{tpu_custom_call.1} parent=1 // pred_check_branch
      %216 = sbr.rel (0) target = $region29
    $region28: #{tpu_custom_call.1} parent=1 // pred_region
      %217 = dma.done [#allocation3], 128
    $region29: #{tpu_custom_call.1} parent=1 // pred_fallthru
      _
    %218 = vsyncpa [#allocation3], 1

</llo_original>
